<compile_context>
chip_gen: v7x
topology: tpu7x:2x2x1
jax: 0.10.0
libtpu: 0.0.40
codegen_flags: <defaults>
</compile_context>

<pallas_src>
import functools

import jax
import jax.numpy as jnp
from jax.experimental import pallas as pl
from jax.experimental.pallas import tpu as pltpu


_M_INNER = 256          # matmul rows per in-kernel sub-tile (acc stays near vregs/MRB)
_MAX_CHUNKS = 12        # static-unroll cap for the in-kernel sub-tile loop
_VMEM_BUDGET = 10 << 20  # byte budget for double-buffered input+output blocks


def _conv_bn_lrelu_kernel(x_ref, w_ref, scale_ref, shift_ref, o_ref, *,
                          tap_offsets, chunks, negative_slope):
    """One (batch, row-tile) grid step.

    x_ref:     (1, 1, L_in, K)       padded row-flattened input (or im2col rows)
    w_ref:     (T, K, Cout_p)        conv taps, VMEM-resident (constant index_map)
    scale_ref: (1, Cout_p) f32       gamma * rsqrt(running_var + eps)
    shift_ref: (1, Cout_p) f32       beta + scale * (conv_bias - running_mean)
    o_ref:     (1, 1, L_out, Cout_p) lane-dense output slab (Cout padded to >=128)
    """
    scale = scale_ref[...]
    shift = shift_ref[...]
    for base, m in chunks:                        # static unroll, bounded by _MAX_CHUNKS
        acc = None
        for t, off in enumerate(tap_offsets):     # uninterrupted dot chain (MRB on v7x)
            d = jnp.dot(x_ref[0, 0, base + off:base + off + m, :], w_ref[t],
                        preferred_element_type=jnp.float32)
            acc = d if acc is None else acc + d
        y = acc * scale + shift                   # conv bias + eval BatchNorm, fused
        y = jnp.where(y >= 0, y, negative_slope * y)      # LeakyReLU
        o_ref[0, 0, base:base + m, :] = y.astype(o_ref.dtype)


def _plan_row_tiles(h, wp2, in_row_bytes, out_row_bytes, row_cap=None):
    """Rows per grid step (th) and number of row tiles (nht)."""
    th_cap = max(1, (_MAX_CHUNKS * _M_INNER) // wp2)          # static-unroll bound
    per_row = 2 * (in_row_bytes + out_row_bytes)              # double-buffered blocks
    th_cap = max(1, min(th_cap, _VMEM_BUDGET // per_row))     # VMEM bound
    if row_cap is not None:
        th_cap = max(1, min(th_cap, row_cap))
    th_cap = min(th_cap, h)
    nht = -(-h // th_cap)
    th = -(-h // nht)                                         # balanced tiles
    return th, nht


def _chunk_schedule(l_out):
    chunks, base = [], 0
    while base < l_out:
        m = min(_M_INNER, l_out - base)
        chunks.append((base, m))
        base += m
    return tuple(chunks)


@functools.partial(jax.jit, static_argnames=("negative_slope", "eps",
                                             "compute_dtype", "max_rows_per_step"))
def conv_dropout_norm_nonlin(x, weight, bias, gamma, beta,
                             running_mean, running_var, *,
                             negative_slope=0.01, eps=1e-5,
                             compute_dtype=None, max_rows_per_step=None):
    """ConvDropoutNormNonlin forward (eval mode). NCHW in -> NCHW out."""
    n, cin, h, w = x.shape
    cout = weight.shape[0]
    wp2 = w + 2

    cdt = jnp.dtype(compute_dtype) if compute_dtype is not None else jnp.dtype(x.dtype)
    out_dtype = x.dtype
    in_isz = cdt.itemsize
    out_isz = jnp.dtype(out_dtype).itemsize

    # channel padding: Cin -> sublane multiple, Cout -> lane-dense (>=128)
    sub = {4: 8, 2: 16, 1: 32}.get(in_isz, 8)
    cin_p = -(-cin // sub) * sub
    cout_p = cout if cout >= 128 else 128

    # tap layout: full wrapper-side im2col (K = 9*Cin_p, one matmul) for small Cin
    # (stem layers), otherwise nine K = Cin_p taps at static offsets.
    use_im2col = 9 * cin_p <= 144
    all_offsets = tuple(kh * wp2 + kw for kh in range(3) for kw in range(3))
    tap_offsets = (0,) if use_im2col else all_offsets
    k_dim = 9 * cin_p if use_im2col else cin_p

    th, nht = _plan_row_tiles(h, wp2,
                              in_row_bytes=wp2 * k_dim * in_isz,
                              out_row_bytes=wp2 * cout_p * out_isz,
                              row_cap=max_rows_per_step)
    h_pad = nht * th
    l_out = th * wp2
    l_in = l_out if use_im2col else (th + 3) * wp2
    chunks = _chunk_schedule(l_out)

    # ---- wrapper layout plumbing: NCHW -> channel-last padded row tiles ----
    x_nhwc = jnp.transpose(x, (0, 2, 3, 1)).astype(cdt)
    x_padded = jnp.pad(x_nhwc, ((0, 0), (1, h_pad - h + 2), (1, 1), (0, cin_p - cin)))
    if nht == 1:
        x_tiles = x_padded[:, None]
    else:   # overlapping row tiles (3-row halo): ~(th+3)/th byte overhead
        x_tiles = jnp.stack(
            [x_padded[:, j * th:j * th + th + 3] for j in range(nht)], axis=1)
    x_flat = x_tiles.reshape(n, nht, (th + 3) * wp2, cin_p)
    if use_im2col:
        x_in = jnp.concatenate(
            [x_flat[:, :, off:off + l_out, :] for off in all_offsets], axis=-1)
    else:
        x_in = x_flat

    # weights: OIHW -> (9, Cin_p, Cout_p), or (1, 9*Cin_p, Cout_p) for im2col
    w9 = jnp.transpose(weight, (2, 3, 1, 0)).reshape(9, cin, cout)
    w9 = jnp.pad(w9, ((0, 0), (0, cin_p - cin), (0, cout_p - cout))).astype(cdt)
    w_k = w9.reshape(1, 9 * cin_p, cout_p) if use_im2col else w9

    # conv bias + eval BatchNorm folded into per-channel scale/shift (f32)
    inv_std = jax.lax.rsqrt(running_var.astype(jnp.float32) + eps)
    scale = gamma.astype(jnp.float32) * inv_std
    shift = (beta.astype(jnp.float32)
             + scale * (bias.astype(jnp.float32) - running_mean.astype(jnp.float32)))
    scale_p = jnp.pad(scale.reshape(1, cout), ((0, 0), (0, cout_p - cout)))
    shift_p = jnp.pad(shift.reshape(1, cout), ((0, 0), (0, cout_p - cout)))

    in_block = l_in * k_dim * in_isz
    out_block = l_out * cout_p * out_isz
    vmem_needed = 2 * (in_block + out_block) + w_k.size * in_isz + 2 * cout_p * 4 + (1 << 20)
    vmem_limit = int(min(100 << 20, max(32 << 20, 2 * vmem_needed)))

    cost = pl.CostEstimate(
        flops=2 * n * nht * l_out * len(tap_offsets) * k_dim * cout_p,
        transcendentals=0,
        bytes_accessed=(x_in.size * in_isz + w_k.size * in_isz
                        + n * nht * l_out * cout_p * out_isz + 2 * cout_p * 4))

    kernel = functools.partial(_conv_bn_lrelu_kernel, tap_offsets=tap_offsets,
                               chunks=chunks, negative_slope=negative_slope)
    out_flat = pl.pallas_call(
        kernel,
        out_shape=jax.ShapeDtypeStruct((n, nht, l_out, cout_p), out_dtype),
        grid=(n, nht),
        in_specs=[
            pl.BlockSpec((1, 1, l_in, k_dim), lambda i, j: (i, j, 0, 0)),
            pl.BlockSpec(w_k.shape, lambda i, j: (0, 0, 0)),    # VMEM-resident
            pl.BlockSpec((1, cout_p), lambda i, j: (0, 0)),     # VMEM-resident
            pl.BlockSpec((1, cout_p), lambda i, j: (0, 0)),     # VMEM-resident
        ],
        out_specs=pl.BlockSpec((1, 1, l_out, cout_p), lambda i, j: (i, j, 0, 0)),
        compiler_params=pltpu.CompilerParams(
            dimension_semantics=("parallel", "parallel"),
            vmem_limit_bytes=vmem_limit),
        cost_estimate=cost,
    )(x_in, w_k, scale_p, shift_p)

    # drop scratch columns, padded rows and padded channels; back to NCHW
    out = out_flat.reshape(n, nht, th, wp2, cout_p)[:, :, :, :w, :cout]
    out = out.reshape(n, h_pad, w, cout)[:, :h]
    return jnp.transpose(out, (0, 3, 1, 2))


class ConvDropoutNormNonlin:
    """Forward-only JAX/Pallas mirror of the PyTorch module (eval mode):
    Conv2d(3x3, s=1, p=1, bias) -> Dropout2d -> BatchNorm2d -> LeakyReLU."""

    def __init__(self, input_channels, output_channels, key,
                 conv_kwargs=None, norm_op_kwargs=None,
                 dropout_op_kwargs=None, nonlin_kwargs=None):
        if nonlin_kwargs is None:
            nonlin_kwargs = {"negative_slope": 0.01, "inplace": True}
        if dropout_op_kwargs is None:
            dropout_op_kwargs = {"p": 0.5, "inplace": True}
        if norm_op_kwargs is None:
            norm_op_kwargs = {"eps": 1e-5, "affine": True, "momentum": 0.1}
        if conv_kwargs is None:
            conv_kwargs = {"kernel_size": 3, "stride": 1, "padding": 1,
                           "dilation": 1, "bias": True}
        assert (conv_kwargs["kernel_size"], conv_kwargs["stride"],
                conv_kwargs["padding"], conv_kwargs["dilation"]) == (3, 1, 1, 1)
        self.negative_slope = float(nonlin_kwargs.get("negative_slope", 0.01))
        self.eps = float(norm_op_kwargs.get("eps", 1e-5))
        self.dropout_p = dropout_op_kwargs.get("p", 0.5)
        # TODO(synk): training-mode Dropout2d and batch-statistic BatchNorm are not
        # implemented; this mirrors the module's eval() forward only.

        kw_, kb_, kg_, kbe_, km_, kv_ = jax.random.split(key, 6)
        bound = 1.0 / float(input_channels * 9) ** 0.5
        self.weight = jax.random.uniform(
            kw_, (output_channels, input_channels, 3, 3), jnp.float32, -bound, bound)
        self.bias = jax.random.uniform(
            kb_, (output_channels,), jnp.float32, -bound, bound)
        self.gamma = 1.0 + 0.1 * jax.random.normal(kg_, (output_channels,), jnp.float32)
        self.beta = 0.1 * jax.random.normal(kbe_, (output_channels,), jnp.float32)
        self.running_mean = 0.1 * jax.random.normal(km_, (output_channels,), jnp.float32)
        self.running_var = jax.random.uniform(kv_, (output_channels,), jnp.float32,
                                              0.5, 1.5)

    def __call__(self, x):
        return conv_dropout_norm_nonlin(
            x, self.weight, self.bias, self.gamma, self.beta,
            self.running_mean, self.running_var,
            negative_slope=self.negative_slope, eps=self.eps)


def _reference_forward(x, weight, bias, gamma, beta, mean, var, *,
                       eps=1e-5, negative_slope=0.01):
    y = jax.lax.conv_general_dilated(
        x.astype(jnp.float32), weight.astype(jnp.float32),
        window_strides=(1, 1), padding=((1, 1), (1, 1)),
        dimension_numbers=("NCHW", "OIHW", "NCHW"),
        precision=jax.lax.Precision.HIGHEST)
    y = y + bias[None, :, None, None]
    y = (y - mean[None, :, None, None]) * jax.lax.rsqrt(
        var[None, :, None, None] + eps)
    y = y * gamma[None, :, None, None] + beta[None, :, None, None]
    return jnp.where(y >= 0, y, negative_slope * y).astype(x.dtype)


if __name__ == "__main__":
    key = jax.random.PRNGKey(0)
    kx, kp, kx2, kp2 = jax.random.split(key, 4)

    # Primary check: stem-like layer (im2col path), batch=2, cin=4, 16x16.
    x = jax.random.normal(kx, (2, 4, 16, 16), dtype=jnp.float32)
    mod = ConvDropoutNormNonlin(4, 8, key=kp)
    y = jax.block_until_ready(mod(x))
    assert y.shape == (2, 8, 16, 16), y.shape
    y_ref = _reference_forward(x, mod.weight, mod.bias, mod.gamma, mod.beta,
                               mod.running_mean, mod.running_var,
                               eps=mod.eps, negative_slope=mod.negative_slope)
    err = float(jnp.max(jnp.abs(y - y_ref)))
    assert jnp.allclose(y, y_ref, atol=1e-3, rtol=1e-3), err

    # Secondary check: wider-channel layer (9-tap path) with forced row tiling
    # (exercises the halo'd multi-row-tile grid).
    x2 = jax.random.normal(kx2, (1, 24, 16, 16), dtype=jnp.float32)
    mod2 = ConvDropoutNormNonlin(24, 32, key=kp2)
    y2 = jax.block_until_ready(
        conv_dropout_norm_nonlin(x2, mod2.weight, mod2.bias, mod2.gamma, mod2.beta,
                                 mod2.running_mean, mod2.running_var,
                                 negative_slope=mod2.negative_slope, eps=mod2.eps,
                                 max_rows_per_step=5))
    y2_ref = _reference_forward(x2, mod2.weight, mod2.bias, mod2.gamma, mod2.beta,
                                mod2.running_mean, mod2.running_var,
                                eps=mod2.eps, negative_slope=mod2.negative_slope)
    err2 = float(jnp.max(jnp.abs(y2 - y2_ref)))
    assert jnp.allclose(y2, y2_ref, atol=1e-3, rtol=1e-3), err2

    print("KERNEL_OK")
</pallas_src>

<mosaic_0001>
module attributes {stable_mosaic.version = 11 : i64} {
  func.func @_conv_bn_lrelu_kernel(%arg0: i32, %arg1: i32, %arg2: memref<1x1x288x72xf32, #tpu.memory_space<vmem>>, %arg3: memref<1x72x128xf32, #tpu.memory_space<vmem>>, %arg4: memref<1x128xf32, #tpu.memory_space<vmem>>, %arg5: memref<1x128xf32, #tpu.memory_space<vmem>>, %arg6: memref<1x1x288x128xf32, #tpu.memory_space<vmem>>) attributes {dimension_semantics = [#tpu.dimension_semantics<parallel>, #tpu.dimension_semantics<parallel>], iteration_bounds = array<i64: 2, 1>, scalar_prefetch = 0 : i64, scratch_operands = 0 : i64, tpu.core_type = #tpu.core_type<tc>, window_params = [{transform_indices = @transform_0, window_bounds = array<i64: 1, 1, 288, 72>}, {pipeline_mode = #tpu.pipeline_mode<synchronous>, transform_indices = @transform_1, window_bounds = array<i64: 1, 72, 128>}, {pipeline_mode = #tpu.pipeline_mode<synchronous>, transform_indices = @transform_2, window_bounds = array<i64: 1, 128>}, {pipeline_mode = #tpu.pipeline_mode<synchronous>, transform_indices = @transform_3, window_bounds = array<i64: 1, 128>}, {transform_indices = @transform_4, window_bounds = array<i64: 1, 1, 288, 128>}]} {
    %c0 = arith.constant 0 : index
    %c0_0 = arith.constant 0 : index
    %0 = vector.load %arg4[%c0, %c0_0] : memref<1x128xf32, #tpu.memory_space<vmem>>, vector<1x128xf32>
    %c0_1 = arith.constant 0 : index
    %c0_2 = arith.constant 0 : index
    %1 = vector.load %arg5[%c0_1, %c0_2] : memref<1x128xf32, #tpu.memory_space<vmem>>, vector<1x128xf32>
    %c0_3 = arith.constant 0 : index
    %c0_4 = arith.constant 0 : index
    %c0_5 = arith.constant 0 : index
    %c0_6 = arith.constant 0 : index
    %2 = vector.load %arg2[%c0_3, %c0_4, %c0_5, %c0_6] : memref<1x1x288x72xf32, #tpu.memory_space<vmem>>, vector<1x1x256x72xf32>
    %3 = vector.shape_cast %2 : vector<1x1x256x72xf32> to vector<256x72xf32>
    %c0_7 = arith.constant 0 : index
    %c0_8 = arith.constant 0 : index
    %c0_9 = arith.constant 0 : index
    %4 = vector.load %arg3[%c0_7, %c0_8, %c0_9] : memref<1x72x128xf32, #tpu.memory_space<vmem>>, vector<1x72x128xf32>
    %5 = vector.shape_cast %4 : vector<1x72x128xf32> to vector<72x128xf32>
    %cst = arith.constant dense<0.000000e+00> : vector<256x128xf32>
    %6 = tpu.matmul %3, %5, %cst {dimension_numbers = #tpu.dot_dimension_numbers<[1], [0], [0], [1], [0, 0, 1, 1], [], []>} : vector<256x72xf32>, vector<72x128xf32>, vector<256x128xf32> -> vector<256x128xf32>
    %7 = vector.broadcast %0 : vector<1x128xf32> to vector<256x128xf32>
    %8 = arith.mulf %6, %7 : vector<256x128xf32>
    %9 = vector.broadcast %1 : vector<1x128xf32> to vector<256x128xf32>
    %10 = arith.addf %8, %9 : vector<256x128xf32>
    %cst_10 = arith.constant 0.000000e+00 : f32
    %11 = vector.broadcast %cst_10 : f32 to vector<256x128xf32>
    %12 = arith.cmpf oge, %10, %11 : vector<256x128xf32>
    %cst_11 = arith.constant 0.00999999977 : f32
    %13 = vector.broadcast %cst_11 : f32 to vector<256x128xf32>
    %14 = arith.mulf %13, %10 : vector<256x128xf32>
    %15 = arith.select %12, %10, %14 : vector<256x128xi1>, vector<256x128xf32>
    %c0_12 = arith.constant 0 : index
    %c0_13 = arith.constant 0 : index
    %c0_14 = arith.constant 0 : index
    %c0_15 = arith.constant 0 : index
    %16 = vector.load %arg6[%c0_12, %c0_13, %c0_14, %c0_15] : memref<1x1x288x128xf32, #tpu.memory_space<vmem>>, vector<1x1x256x128xf32>
    %17 = vector.shape_cast %16 : vector<1x1x256x128xf32> to vector<256x128xf32>
    %18 = vector.shape_cast %15 : vector<256x128xf32> to vector<1x1x256x128xf32>
    tpu.vector_store %arg6[%c0_12, %c0_13, %c0_14, %c0_15], %18 {strides = array<i32>} : memref<1x1x288x128xf32, #tpu.memory_space<vmem>>, vector<1x1x256x128xf32>,
    %c0_16 = arith.constant 0 : index
    %c0_17 = arith.constant 0 : index
    %c256 = arith.constant 256 : index
    %c0_18 = arith.constant 0 : index
    %19 = vector.load %arg2[%c0_16, %c0_17, %c256, %c0_18] : memref<1x1x288x72xf32, #tpu.memory_space<vmem>>, vector<1x1x32x72xf32>
    %20 = vector.shape_cast %19 : vector<1x1x32x72xf32> to vector<32x72xf32>
    %c0_19 = arith.constant 0 : index
    %c0_20 = arith.constant 0 : index
    %c0_21 = arith.constant 0 : index
    %21 = vector.load %arg3[%c0_19, %c0_20, %c0_21] : memref<1x72x128xf32, #tpu.memory_space<vmem>>, vector<1x72x128xf32>
    %22 = vector.shape_cast %21 : vector<1x72x128xf32> to vector<72x128xf32>
    %cst_22 = arith.constant dense<0.000000e+00> : vector<32x128xf32>
    %23 = tpu.matmul %20, %22, %cst_22 {dimension_numbers = #tpu.dot_dimension_numbers<[1], [0], [0], [1], [0, 0, 1, 1], [], []>} : vector<32x72xf32>, vector<72x128xf32>, vector<32x128xf32> -> vector<32x128xf32>
    %24 = vector.broadcast %0 : vector<1x128xf32> to vector<32x128xf32>
    %25 = arith.mulf %23, %24 : vector<32x128xf32>
    %26 = vector.broadcast %1 : vector<1x128xf32> to vector<32x128xf32>
    %27 = arith.addf %25, %26 : vector<32x128xf32>
    %cst_23 = arith.constant 0.000000e+00 : f32
    %28 = vector.broadcast %cst_23 : f32 to vector<32x128xf32>
    %29 = arith.cmpf oge, %27, %28 : vector<32x128xf32>
    %cst_24 = arith.constant 0.00999999977 : f32
    %30 = vector.broadcast %cst_24 : f32 to vector<32x128xf32>
    %31 = arith.mulf %30, %27 : vector<32x128xf32>
    %32 = arith.select %29, %27, %31 : vector<32x128xi1>, vector<32x128xf32>
    %c0_25 = arith.constant 0 : index
    %c0_26 = arith.constant 0 : index
    %c256_27 = arith.constant 256 : index
    %c0_28 = arith.constant 0 : index
    %33 = vector.load %arg6[%c0_25, %c0_26, %c256_27, %c0_28] : memref<1x1x288x128xf32, #tpu.memory_space<vmem>>, vector<1x1x32x128xf32>
    %34 = vector.shape_cast %33 : vector<1x1x32x128xf32> to vector<32x128xf32>
    %35 = vector.shape_cast %32 : vector<32x128xf32> to vector<1x1x32x128xf32>
    tpu.vector_store %arg6[%c0_25, %c0_26, %c256_27, %c0_28], %35 {strides = array<i32>} : memref<1x1x288x128xf32, #tpu.memory_space<vmem>>, vector<1x1x32x128xf32>,
    return
  }
  func.func @transform_0(%arg0: i32, %arg1: i32) -> (i32, i32, i32, i32) {
    %c0_i32 = arith.constant 0 : i32
    %c0_i32_0 = arith.constant 0 : i32
    %c0_i32_1 = arith.constant 0 : i32
    return %arg0, %arg1, %c0_i32, %c0_i32_0 : i32, i32, i32, i32
  }
  func.func @transform_1(%arg0: i32, %arg1: i32) -> (i32, i32, i32) {
    %c0_i32 = arith.constant 0 : i32
    %c0_i32_0 = arith.constant 0 : i32
    %c0_i32_1 = arith.constant 0 : i32
    %c0_i32_2 = arith.constant 0 : i32
    return %c0_i32, %c0_i32_0, %c0_i32_1 : i32, i32, i32
  }
  func.func @transform_2(%arg0: i32, %arg1: i32) -> (i32, i32) {
    %c0_i32 = arith.constant 0 : i32
    %c0_i32_0 = arith.constant 0 : i32
    %c0_i32_1 = arith.constant 0 : i32
    return %c0_i32, %c0_i32_0 : i32, i32
  }
  func.func @transform_3(%arg0: i32, %arg1: i32) -> (i32, i32) {
    %c0_i32 = arith.constant 0 : i32
    %c0_i32_0 = arith.constant 0 : i32
    %c0_i32_1 = arith.constant 0 : i32
    return %c0_i32, %c0_i32_0 : i32, i32
  }
  func.func @transform_4(%arg0: i32, %arg1: i32) -> (i32, i32, i32, i32) {
    %c0_i32 = arith.constant 0 : i32
    %c0_i32_0 = arith.constant 0 : i32
    %c0_i32_1 = arith.constant 0 : i32
    return %arg0, %arg1, %c0_i32, %c0_i32_0 : i32, i32, i32, i32
  }
}

</mosaic_0001>

<llo_original>
// kernel: conv_dropout_norm_nonlin.1
$region0: #{conv_dropout_norm_nonlin.1}
  #allocation0 [shape = 'u32[]', space=smem, size = 0x4, offset = 0x4, fixed_abs, tag = 'smem constant byte address 0x4 - core index']
  #allocation1 [shape = 'u32[144,128]{1,0:T(1,128)}', space=vmem, size = 0x12000, scoped, tag = 'internal scratch']
  %s0 = inlined_call_operand.vmem [shape: f32[2,1,288,72], index: 0, kind: input, shape index: {}]
  %s1 = inlined_call_operand.vmem [shape: f32[1,72,128], index: 1, kind: input, shape index: {}]
  %s2 = inlined_call_operand.vmem [shape: f32[1,128], index: 2, kind: input, shape index: {}]
  %s3 = inlined_call_operand.vmem [shape: f32[1,128], index: 3, kind: input, shape index: {}]
  %s4 = inlined_call_operand.vmem [shape: f32[2,1,288,128], index: 4, kind: output, shape index: {}]
  %s5 = sld [smem:[#allocation0]]
  $region49: #{conv_dropout_norm_nonlin.1} parent=0
    _
  %s7 = ssub.s32 1, %s5
  %s8 = scalar_select 0, %s7, %s5
  loop: start=0, step=1, limit=4
  $region2: #{conv_dropout_norm_nonlin.1} parent=0 // loop_pre_header
    _
  $region3: #{conv_dropout_norm_nonlin.1} parent=0 // loop_header
    %s10 = sphi 0, %s14
    %p11 = scmp.ge.s32.totalorder %s10, 4
    %s17 = sphi 0, %s29
    %s18 = sphi 0, %s25
    %s19 = sphi 0, %s17
    %s20 = sphi 0, %s18
    %s21 = sphi 0, %s19
    %s22 = sphi 0, %s20
    %s34 = sphi 0, %s36
    %s37 = sphi 0, %s34
    %s38 = sphi 0, %s37
    %s54 = sphi 0, %s38
    %s58 = sphi 0, %s58
    %s60 = sphi 0, %s58
    %s61 = sphi 0, %s60
    %s75 = sphi 0, %s61
    %s79 = sphi 0, %s79
    %s81 = sphi 0, %s79
    %s82 = sphi 0, %s81
    %s96 = sphi 0, %s82
    %s100 = sphi 0, %s100
    %s102 = sphi 0, %s100
    %s103 = sphi 0, %s102
    %s117 = sphi 0, %s103
    %s125 = sphi 0, %s127
    %s128 = sphi 0, %s125
    %s129 = sphi 0, %s128
    %s145 = sphi 0, %s129
  $region4: #{conv_dropout_norm_nonlin.1} parent=0 // loop_header_branch
    %13 = sbr.rel (%p11) target = $region8
  $region5: #{conv_dropout_norm_nonlin.1} parent=0 // loop_body
    %s15 = ssub.s32 %s10, 1
    %s16 = ssub.s32 %s10, 2
    %s23 = sadd.s32 1, %s18
    %p24 = scmp.ge.s32.totalorder %s23, 1
    %s25 = scalar_select %p24, 0, %s23
    %s26 = sadd.s32 1, %s17
    %s27 = scalar_select %p24, %s26, %s17
    %p28 = scmp.ge.s32.totalorder %s27, 2
    %s29 = scalar_select %p28, 0, %s27
    %s30 = ssub.s32 %s17, %s29
    %s31 = ssub.s32 %s18, %s25
    %s32 = sor.u32 %s30, %s31
    %p33 = scmp.eq.s32.totalorder %s32, 0
    %s35 = sadd.s32 %s34, 1
    %s36 = scalar_select %p33, %s34, %s35
    %p39 = pneg %p33
    %p40 = scmp.eq.s32.totalorder %s10, 1
    %p41 = por %p39, %p40
    %p42 = scmp.ne.s32.totalorder %s34, %s37
    %p43 = scmp.eq.s32.totalorder %s10, 0
    %p44 = por %p42, %p43
    %p45 = scmp.ne.s32.totalorder %s34, %s37
    %p46 = scmp.eq.s32.totalorder %s15, 1
    %p47 = por %p45, %p46
    %p48 = scmp.ne.s32.totalorder %s37, %s38
    %p49 = scmp.eq.s32.totalorder %s15, 0
    %p50 = por %p48, %p49
    %p51 = scmp.ne.s32.totalorder %s37, %s38
    %p52 = scmp.eq.s32.totalorder %s16, 1
    %p53 = por %p51, %p52
    %p55 = scmp.ne.s32.totalorder %s38, %s54
    %p56 = scmp.eq.s32.totalorder %s16, 0
    %p57 = por %p55, %p56
    %s59 = sadd.s32 %s58, 1
    %p62 = scmp.eq.s32.totalorder %s10, 1
    %p63 = scmp.ne.s32.totalorder %s58, %s60
    %p64 = scmp.eq.s32.totalorder %s10, 0
    %p65 = por %p63, %p64
    %p66 = scmp.ne.s32.totalorder %s58, %s60
    %p67 = scmp.eq.s32.totalorder %s15, 1
    %p68 = por %p66, %p67
    %p69 = scmp.ne.s32.totalorder %s60, %s61
    %p70 = scmp.eq.s32.totalorder %s15, 0
    %p71 = por %p69, %p70
    %p72 = scmp.ne.s32.totalorder %s60, %s61
    %p73 = scmp.eq.s32.totalorder %s16, 1
    %p74 = por %p72, %p73
    %p76 = scmp.ne.s32.totalorder %s61, %s75
    %p77 = scmp.eq.s32.totalorder %s16, 0
    %p78 = por %p76, %p77
    %s80 = sadd.s32 %s79, 1
    %p83 = scmp.eq.s32.totalorder %s10, 1
    %p84 = scmp.ne.s32.totalorder %s79, %s81
    %p85 = scmp.eq.s32.totalorder %s10, 0
    %p86 = por %p84, %p85
    %p87 = scmp.ne.s32.totalorder %s79, %s81
    %p88 = scmp.eq.s32.totalorder %s15, 1
    %p89 = por %p87, %p88
    %p90 = scmp.ne.s32.totalorder %s81, %s82
    %p91 = scmp.eq.s32.totalorder %s15, 0
    %p92 = por %p90, %p91
    %p93 = scmp.ne.s32.totalorder %s81, %s82
    %p94 = scmp.eq.s32.totalorder %s16, 1
    %p95 = por %p93, %p94
    %p97 = scmp.ne.s32.totalorder %s82, %s96
    %p98 = scmp.eq.s32.totalorder %s16, 0
    %p99 = por %p97, %p98
    %s101 = sadd.s32 %s100, 1
    %p104 = scmp.eq.s32.totalorder %s10, 1
    %p105 = scmp.ne.s32.totalorder %s100, %s102
    %p106 = scmp.eq.s32.totalorder %s10, 0
    %p107 = por %p105, %p106
    %p108 = scmp.ne.s32.totalorder %s100, %s102
    %p109 = scmp.eq.s32.totalorder %s15, 1
    %p110 = por %p108, %p109
    %p111 = scmp.ne.s32.totalorder %s102, %s103
    %p112 = scmp.eq.s32.totalorder %s15, 0
    %p113 = por %p111, %p112
    %p114 = scmp.ne.s32.totalorder %s102, %s103
    %p115 = scmp.eq.s32.totalorder %s16, 1
    %p116 = por %p114, %p115
    %p118 = scmp.ne.s32.totalorder %s103, %s117
    %p119 = scmp.eq.s32.totalorder %s16, 0
    %p120 = por %p118, %p119
    %s121 = ssub.s32 %s17, %s29
    %s122 = ssub.s32 %s18, %s25
    %s123 = sor.u32 %s121, %s122
    %p124 = scmp.eq.s32.totalorder %s123, 0
    %s126 = sadd.s32 %s125, 1
    %s127 = scalar_select %p124, %s125, %s126
    %p130 = pneg %p124
    %p131 = scmp.eq.s32.totalorder %s10, 1
    %p132 = por %p130, %p131
    %p133 = scmp.ne.s32.totalorder %s125, %s128
    %p134 = scmp.eq.s32.totalorder %s10, 0
    %p135 = por %p133, %p134
    %p136 = scmp.ne.s32.totalorder %s125, %s128
    %p137 = scmp.eq.s32.totalorder %s15, 1
    %p138 = por %p136, %p137
    %p139 = scmp.ne.s32.totalorder %s128, %s129
    %p140 = scmp.eq.s32.totalorder %s15, 0
    %p141 = por %p139, %p140
    %p142 = scmp.ne.s32.totalorder %s128, %s129
    %p143 = scmp.eq.s32.totalorder %s16, 1
    %p144 = por %p142, %p143
    %p146 = scmp.ne.s32.totalorder %s129, %s145
    %p147 = scmp.eq.s32.totalorder %s16, 0
    %p148 = por %p146, %p147
    %p149 = scmp.le.s32.totalorder 1, %s10
    %p150 = scmp.lt.s32.totalorder %s10, 3
    %p151 = pnand %p149, %p150
    %p152 = pneg %p151
    // Predicated region
    $region9: #{conv_dropout_norm_nonlin.1} parent=5 // pred_check
      _
    $region10: #{conv_dropout_norm_nonlin.1} parent=5 // pred_check_branch
      %154 = sbr.rel (%p151) target = $region12
    $region11: #{conv_dropout_norm_nonlin.1} parent=5 // pred_region
      %s155 = ssub.s32 %s10, 1
      // Predicated region
      $region13: #{conv_dropout_norm_nonlin.1} parent=11 // pred_check
        %p156 = pneg %p71
      $region14: #{conv_dropout_norm_nonlin.1} parent=11 // pred_check_branch
        %158 = sbr.rel (%p156) target = $region16
      $region15: #{conv_dropout_norm_nonlin.1} parent=11 // pred_region
        _
      $region16: #{conv_dropout_norm_nonlin.1} parent=11 // pred_fallthru
        _
      // Predicated region
      $region17: #{conv_dropout_norm_nonlin.1} parent=11 // pred_check
        %p159 = pneg %p92
      $region18: #{conv_dropout_norm_nonlin.1} parent=11 // pred_check_branch
        %161 = sbr.rel (%p159) target = $region20
      $region19: #{conv_dropout_norm_nonlin.1} parent=11 // pred_region
        _
      $region20: #{conv_dropout_norm_nonlin.1} parent=11 // pred_fallthru
        _
      // Predicated region
      $region21: #{conv_dropout_norm_nonlin.1} parent=11 // pred_check
        %p162 = pneg %p113
      $region22: #{conv_dropout_norm_nonlin.1} parent=11 // pred_check_branch
        %164 = sbr.rel (%p162) target = $region24
      $region23: #{conv_dropout_norm_nonlin.1} parent=11 // pred_region
        _
      $region24: #{conv_dropout_norm_nonlin.1} parent=11 // pred_fallthru
        _
    $region12: #{conv_dropout_norm_nonlin.1} parent=5 // pred_fallthru
      _
    %p165 = scmp.lt.s32.totalorder %s10, 2
    // Predicated region
    $region25: #{conv_dropout_norm_nonlin.1} parent=5 // pred_check
      %p166 = pneg %p165
    $region26: #{conv_dropout_norm_nonlin.1} parent=5 // pred_check_branch
      %168 = sbr.rel (%p166) target = $region28
    $region27: #{conv_dropout_norm_nonlin.1} parent=5 // pred_region
      // Predicated region
      $region29: #{conv_dropout_norm_nonlin.1} parent=27 // pred_check
        %p169 = pneg %p44
      $region30: #{conv_dropout_norm_nonlin.1} parent=27 // pred_check_branch
        %171 = sbr.rel (%p169) target = $region32
      $region31: #{conv_dropout_norm_nonlin.1} parent=27 // pred_region
        %p172 = scmp.lt.s32.totalorder %s17, 1
        %s173 = scalar_select %p172, %s17, 1
        %p174 = scmp.lt.s32.totalorder %s18, 0
        %s175 = scalar_select %p174, %s18, 0
        %s176 = smul.addr %s175, 36
        %s177 = smul.addr %s173, 36
        %s178 = sadd.s32 %s176, %s177
        %s179 = smul.addr %s178, 8
        %s180 = scalar_lea.vmem %s0, %s179
      $region32: #{conv_dropout_norm_nonlin.1} parent=27 // pred_fallthru
        _
    $region28: #{conv_dropout_norm_nonlin.1} parent=5 // pred_fallthru
      _
    %p181 = scmp.le.s32.totalorder 1, %s10
    %p182 = scmp.lt.s32.totalorder %s10, 3
    %p183 = pnand %p181, %p182
    %p184 = pneg %p183
    // Predicated region
    $region33: #{conv_dropout_norm_nonlin.1} parent=5 // pred_check
      _
    $region34: #{conv_dropout_norm_nonlin.1} parent=5 // pred_check_branch
      %186 = sbr.rel (%p183) target = $region36
    $region35: #{conv_dropout_norm_nonlin.1} parent=5 // pred_region
      %s187 = ssub.s32 %s10, 1
      %p188 = scmp.lt.s32.totalorder %s19, 1
      %s189 = scalar_select %p188, %s19, 1
      %p190 = scmp.lt.s32.totalorder %s20, 0
      %s191 = scalar_select %p190, %s20, 0
      %s192 = smul.addr %s191, 36
      %s193 = smul.addr %s189, 36
      %s194 = sadd.s32 %s192, %s193
      %s195 = smul.addr %s194, 8
      %s196 = scalar_lea.vmem %s0, %s195
      %p197 = pneg %p50
      %p198 = pneg %p47
      %p199 = pneg %p71
      %p200 = pneg %p68
      %p201 = pneg %p92
      %p202 = pneg %p89
      %p203 = pneg %p113
      %p204 = pneg %p110
      %p205 = pneg %p141
      %p206 = pneg %p138
      %p207 = scmp.lt.s32.totalorder %s19, 1
      %s208 = scalar_select %p207, %s19, 1
      %p209 = scmp.lt.s32.totalorder %s20, 0
      %s210 = scalar_select %p209, %s20, 0
      %s211 = smul.addr %s210, 36
      %s212 = smul.addr %s208, 36
      %s213 = sadd.s32 %s211, %s212
      %s214 = smul.addr %s213, 8
      %s215 = scalar_lea.vmem %s4, %s214
      %p216 = scmp.lt.s32.totalorder %s19, 1
      %s217 = scalar_select %p216, %s19, 1
      %p218 = scmp.lt.s32.totalorder %s20, 0
      %s219 = scalar_select %p218, %s20, 0
      %s220 = smul.addr %s219, 36
      %s221 = smul.addr %s217, 36
      %s222 = sadd.s32 %s220, %s221
      %s223 = smul.addr %s222, 8
      %s224 = scalar_lea.vmem %s0, %s223
      %p225 = scmp.lt.s32.totalorder %s19, 1
      %s226 = scalar_select %p225, %s19, 1
      %p227 = scmp.lt.s32.totalorder %s20, 0
      %s228 = scalar_select %p227, %s20, 0
      %s229 = smul.addr %s228, 36
      %s230 = smul.addr %s226, 36
      %s231 = sadd.s32 %s229, %s230
      %s232 = smul.addr %s231, 8
      %s233 = scalar_lea.vmem %s4, %s232
      %v234 = vld [vmem:[%s2] sm:$0x1]
      %v235 = vld [vmem:[%s3] sm:$0x1]
      %v236 = vld [vmem:[%s224] sm:$0xff]
      %v237 = vld [vmem:[%s224 + $0x8] sm:$0xff]
      %v238 = vld [vmem:[%s224 + $0x10] sm:$0xff]
      %v239 = vld [vmem:[%s224 + $0x18] sm:$0xff]
      %v240 = vld [vmem:[%s224 + $0x20] sm:$0xff]
      %v241 = vld [vmem:[%s224 + $0x28] sm:$0xff]
      %v242 = vld [vmem:[%s224 + $0x30] sm:$0xff]
      %v243 = vld [vmem:[%s224 + $0x38] sm:$0xff]
      %v244 = vld [vmem:[%s224 + $0x40] sm:$0xff]
      %v245 = vld [vmem:[%s224 + $0x48] sm:$0xff]
      %v246 = vld [vmem:[%s224 + $0x50] sm:$0xff]
      %v247 = vld [vmem:[%s224 + $0x58] sm:$0xff]
      %v248 = vld [vmem:[%s224 + $0x60] sm:$0xff]
      %v249 = vld [vmem:[%s224 + $0x68] sm:$0xff]
      %v250 = vld [vmem:[%s224 + $0x70] sm:$0xff]
      %v251 = vld [vmem:[%s224 + $0x78] sm:$0xff]
      %v252 = vld [vmem:[%s224 + $0x80] sm:$0xff]
      %v253 = vld [vmem:[%s224 + $0x88] sm:$0xff]
      %v254 = vld [vmem:[%s224 + $0x90] sm:$0xff]
      %v255 = vld [vmem:[%s224 + $0x98] sm:$0xff]
      %v256 = vld [vmem:[%s224 + $0xa0] sm:$0xff]
      %v257 = vld [vmem:[%s224 + $0xa8] sm:$0xff]
      %v258 = vld [vmem:[%s224 + $0xb0] sm:$0xff]
      %v259 = vld [vmem:[%s224 + $0xb8] sm:$0xff]
      %v260 = vld [vmem:[%s224 + $0xc0] sm:$0xff]
      %v261 = vld [vmem:[%s224 + $0xc8] sm:$0xff]
      %v262 = vld [vmem:[%s224 + $0xd0] sm:$0xff]
      %v263 = vld [vmem:[%s224 + $0xd8] sm:$0xff]
      %v264 = vld [vmem:[%s224 + $0xe0] sm:$0xff]
      %v265 = vld [vmem:[%s224 + $0xe8] sm:$0xff]
      %v266 = vld [vmem:[%s224 + $0xf0] sm:$0xff]
      %v267 = vld [vmem:[%s224 + $0xf8] sm:$0xff]
      %v268 = vld [vmem:[%s1] sm:$0xff]
      %v269 = vld [vmem:[%s1 + $0x8] sm:$0xff]
      %v270 = vld [vmem:[%s1 + $0x10] sm:$0xff]
      %v271 = vld [vmem:[%s1 + $0x18] sm:$0xff]
      %v272 = vld [vmem:[%s1 + $0x20] sm:$0xff]
      %v273 = vld [vmem:[%s1 + $0x28] sm:$0xff]
      %v274 = vld [vmem:[%s1 + $0x30] sm:$0xff]
      %v275 = vld [vmem:[%s1 + $0x38] sm:$0xff]
      %v276 = vld [vmem:[%s1 + $0x40] sm:$0xff]
      %vm277 = vcmask 588800
      %v279 = vsel %vm277, %v236, 0
      %v282 = vsel %vm277, %v237, 0
      %v285 = vsel %vm277, %v238, 0
      %v288 = vsel %vm277, %v239, 0
      %v291 = vsel %vm277, %v240, 0
      %v294 = vsel %vm277, %v241, 0
      %v297 = vsel %vm277, %v242, 0
      %v300 = vsel %vm277, %v243, 0
      %v303 = vsel %vm277, %v244, 0
      %v306 = vsel %vm277, %v245, 0
      %v309 = vsel %vm277, %v246, 0
      %v312 = vsel %vm277, %v247, 0
      %v315 = vsel %vm277, %v248, 0
      %v318 = vsel %vm277, %v249, 0
      %v321 = vsel %vm277, %v250, 0
      %v324 = vsel %vm277, %v251, 0
      %v327 = vsel %vm277, %v252, 0
      %v330 = vsel %vm277, %v253, 0
      %v333 = vsel %vm277, %v254, 0
      %v336 = vsel %vm277, %v255, 0
      %v339 = vsel %vm277, %v256, 0
      %v342 = vsel %vm277, %v257, 0
      %v345 = vsel %vm277, %v258, 0
      %v348 = vsel %vm277, %v259, 0
      %v351 = vsel %vm277, %v260, 0
      %v354 = vsel %vm277, %v261, 0
      %v357 = vsel %vm277, %v262, 0
      %v360 = vsel %vm277, %v263, 0
      %v363 = vsel %vm277, %v264, 0
      %v366 = vsel %vm277, %v265, 0
      %v369 = vsel %vm277, %v266, 0
      %v372 = vsel %vm277, %v267, 0
      %374 = vmatprep.subr.mxu0 0.0
      %375 = vmatpush1.msra.mxu0 %v268
      %376 = vmatprep.subr.mxu0 0.0
      %377 = vmatpush1.msra.mxu0 %v269
      %378 = vmatprep.subr.mxu0 0.0
      %379 = vmatpush1.msra.mxu0 %v270
      %380 = vmatprep.subr.mxu0 0.0
      %381 = vmatpush1.msra.mxu0 %v271
      %382 = vmatprep.subr.mxu0 0.0
      %383 = vmatpush1.msra.mxu0 %v272
      %384 = vmatprep.subr.mxu0 0.0
      %385 = vmatpush1.msra.mxu0 %v273
      %386 = vmatprep.subr.mxu0 0.0
      %387 = vmatpush1.msra.mxu0 %v274
      %388 = vmatprep.subr.mxu0 0.0
      %389 = vmatpush1.msra.mxu0 %v275
      %390 = vmatprep.subr.mxu0 0.0
      %391 = vmatpush1.msra.mxu0 %v276
      %392 = vmatprep.subr.mxu0 0.0
      %393 = vmatpush1.msra.mxu0 0.0
      %394 = vmatprep.subr.mxu0 0.0
      %395 = vmatpush1.msra.mxu0 0.0
      %396 = vmatprep.subr.mxu0 0.0
      %397 = vmatpush1.msra.mxu0 0.0
      %398 = vmatprep.subr.mxu0 0.0
      %399 = vmatpush1.msra.mxu0 0.0
      %400 = vmatprep.subr.mxu0 0.0
      %401 = vmatpush1.msra.mxu0 0.0
      %402 = vmatprep.subr.mxu0 0.0
      %403 = vmatpush1.msra.mxu0 0.0
      %404 = vmatprep.subr.mxu0 0.0
      %405 = vmatpush1.msra.mxu0 0.0
      %406 = vmatprep.subr.mxu0 0.0
      %407 = vmatpush1.msra.mxu0 0.0
      %408 = vmatprep.subr.mxu0 0.0
      %409 = vmatpush1.msra.mxu0 0.0
      %410 = vmatprep.subr.mxu0 0.0
      %411 = vmatpush1.msra.mxu0 0.0
      %412 = vmatprep.subr.mxu0 0.0
      %413 = vmatpush1.msra.mxu0 0.0
      %414 = vmatprep.subr.mxu0 0.0
      %415 = vmatpush1.msra.mxu0 0.0
      %416 = vmatprep.subr.mxu0 0.0
      %417 = vmatpush1.msra.mxu0 0.0
      %418 = vmatprep.subr.mxu0 0.0
      %419 = vmatpush1.msra.mxu0 0.0
      %420 = vmatprep.subr.mxu0 0.0
      %421 = vmatpush1.msra.mxu0 0.0
      %422 = vmatprep.subr.mxu0 0.0
      %423 = vmatpush1.msra.mxu0 0.0
      %424 = vmatprep.subr.mxu0 0.0
      %425 = vmatpush1.msra.mxu0 0.0
      %426 = vmatprep.subr.mxu0 0.0
      %427 = vmatpush1.msra.mxu0 0.0
      %428 = vmatprep.subr.mxu0 0.0
      %429 = vmatpush1.msra.mxu0 0.0
      %430 = vmatprep.subr.mxu0 0.0
      %431 = vmatpush1.msra.mxu0 0.0
      %432 = vmatprep.subr.mxu0 0.0
      %433 = vmatpush1.msra.mxu0 0.0
      %434 = vmatprep.subr.mxu0 0.0
      %435 = vmatpush1.msra.mxu0 0.0
      %436 = vmatprep.subr.mxu0 0.0
      %437 = vmatpush1.msra.mxu0 0.0
      %438 = vmatprep.mubr.f32.mxu0 0.0
      %439 = vmatmul.mubr.f32.gmra.mrb[0].mxu0 %v279
      %v440 = vpop.f32.mrb[0].mxu0
      %v441 = vadd.f32 0.0, %v440
      %v442 = vpop.f32.mrb[0].mxu0
      %443 = vmatprep.mubr.f32.mxu0 0.0
      %444 = vmatmul.mubr.f32.gmra.mrb[0].mxu0 %v282
      %v445 = vpop.f32.mrb[0].mxu0
      %v446 = vadd.f32 0.0, %v445
      %v447 = vpop.f32.mrb[0].mxu0
      %448 = vmatprep.mubr.f32.mxu0 0.0
      %449 = vmatmul.mubr.f32.gmra.mrb[0].mxu0 %v285
      %v450 = vpop.f32.mrb[0].mxu0
      %v451 = vadd.f32 0.0, %v450
      %v452 = vpop.f32.mrb[0].mxu0
      %453 = vmatprep.mubr.f32.mxu0 0.0
      %454 = vmatmul.mubr.f32.gmra.mrb[0].mxu0 %v288
      %v455 = vpop.f32.mrb[0].mxu0
      %v456 = vadd.f32 0.0, %v455
      %v457 = vpop.f32.mrb[0].mxu0
      %458 = vmatprep.mubr.f32.mxu0 0.0
      %459 = vmatmul.mubr.f32.gmra.mrb[0].mxu0 %v291
      %v460 = vpop.f32.mrb[0].mxu0
      %v461 = vadd.f32 0.0, %v460
      %v462 = vpop.f32.mrb[0].mxu0
      %463 = vmatprep.mubr.f32.mxu0 0.0
      %464 = vmatmul.mubr.f32.gmra.mrb[0].mxu0 %v294
      %v465 = vpop.f32.mrb[0].mxu0
      %v466 = vadd.f32 0.0, %v465
      %v467 = vpop.f32.mrb[0].mxu0
      %468 = vmatprep.mubr.f32.mxu0 0.0
      %469 = vmatmul.mubr.f32.gmra.mrb[0].mxu0 %v297
      %v470 = vpop.f32.mrb[0].mxu0
      %v471 = vadd.f32 0.0, %v470
      %v472 = vpop.f32.mrb[0].mxu0
      %473 = vmatprep.mubr.f32.mxu0 0.0
      %474 = vmatmul.mubr.f32.gmra.mrb[0].mxu0 %v300
      %v475 = vpop.f32.mrb[0].mxu0
      %v476 = vadd.f32 0.0, %v475
      %v477 = vpop.f32.mrb[0].mxu0
      %478 = vmatprep.mubr.f32.mxu0 0.0
      %479 = vmatmul.mubr.f32.gmra.mrb[0].mxu0 %v303
      %v480 = vpop.f32.mrb[0].mxu0
      %v481 = vadd.f32 0.0, %v480
      %v482 = vpop.f32.mrb[0].mxu0
      %483 = vmatprep.mubr.f32.mxu0 0.0
      %484 = vmatmul.mubr.f32.gmra.mrb[0].mxu0 %v306
      %v485 = vpop.f32.mrb[0].mxu0
      %v486 = vadd.f32 0.0, %v485
      %v487 = vpop.f32.mrb[0].mxu0
      %488 = vmatprep.mubr.f32.mxu0 0.0
      %489 = vmatmul.mubr.f32.gmra.mrb[0].mxu0 %v309
      %v490 = vpop.f32.mrb[0].mxu0
      %v491 = vadd.f32 0.0, %v490
      %v492 = vpop.f32.mrb[0].mxu0
      %493 = vmatprep.mubr.f32.mxu0 0.0
      %494 = vmatmul.mubr.f32.gmra.mrb[0].mxu0 %v312
      %v495 = vpop.f32.mrb[0].mxu0
      %v496 = vadd.f32 0.0, %v495
      %v497 = vpop.f32.mrb[0].mxu0
      %498 = vmatprep.mubr.f32.mxu0 0.0
      %499 = vmatmul.mubr.f32.gmra.mrb[0].mxu0 %v315
      %v500 = vpop.f32.mrb[0].mxu0
      %v501 = vadd.f32 0.0, %v500
      %v502 = vpop.f32.mrb[0].mxu0
      %503 = vmatprep.mubr.f32.mxu0 0.0
      %504 = vmatmul.mubr.f32.gmra.mrb[0].mxu0 %v318
      %v505 = vpop.f32.mrb[0].mxu0
      %v506 = vadd.f32 0.0, %v505
      %v507 = vpop.f32.mrb[0].mxu0
      %508 = vmatprep.mubr.f32.mxu0 0.0
      %509 = vmatmul.mubr.f32.gmra.mrb[0].mxu0 %v321
      %v510 = vpop.f32.mrb[0].mxu0
      %v511 = vadd.f32 0.0, %v510
      %v512 = vpop.f32.mrb[0].mxu0
      %513 = vmatprep.mubr.f32.mxu0 0.0
      %514 = vmatmul.mubr.f32.gmra.mrb[0].mxu0 %v324
      %v515 = vpop.f32.mrb[0].mxu0
      %v516 = vadd.f32 0.0, %v515
      %v517 = vpop.f32.mrb[0].mxu0
      %518 = vmatprep.mubr.f32.mxu0 0.0
      %519 = vmatmul.mubr.f32.gmra.mrb[0].mxu0 %v327
      %v520 = vpop.f32.mrb[0].mxu0
      %v521 = vadd.f32 0.0, %v520
      %v522 = vpop.f32.mrb[0].mxu0
      %523 = vmatprep.mubr.f32.mxu0 0.0
      %524 = vmatmul.mubr.f32.gmra.mrb[0].mxu0 %v330
      %v525 = vpop.f32.mrb[0].mxu0
      %v526 = vadd.f32 0.0, %v525
      %v527 = vpop.f32.mrb[0].mxu0
      %528 = vmatprep.mubr.f32.mxu0 0.0
      %529 = vmatmul.mubr.f32.gmra.mrb[0].mxu0 %v333
      %v530 = vpop.f32.mrb[0].mxu0
      %v531 = vadd.f32 0.0, %v530
      %v532 = vpop.f32.mrb[0].mxu0
      %533 = vmatprep.mubr.f32.mxu0 0.0
      %534 = vmatmul.mubr.f32.gmra.mrb[0].mxu0 %v336
      %v535 = vpop.f32.mrb[0].mxu0
      %v536 = vadd.f32 0.0, %v535
      %v537 = vpop.f32.mrb[0].mxu0
      %538 = vmatprep.mubr.f32.mxu0 0.0
      %539 = vmatmul.mubr.f32.gmra.mrb[0].mxu0 %v339
      %v540 = vpop.f32.mrb[0].mxu0
      %v541 = vadd.f32 0.0, %v540
      %v542 = vpop.f32.mrb[0].mxu0
      %543 = vmatprep.mubr.f32.mxu0 0.0
      %544 = vmatmul.mubr.f32.gmra.mrb[0].mxu0 %v342
      %v545 = vpop.f32.mrb[0].mxu0
      %v546 = vadd.f32 0.0, %v545
      %v547 = vpop.f32.mrb[0].mxu0
      %548 = vmatprep.mubr.f32.mxu0 0.0
      %549 = vmatmul.mubr.f32.gmra.mrb[0].mxu0 %v345
      %v550 = vpop.f32.mrb[0].mxu0
      %v551 = vadd.f32 0.0, %v550
      %v552 = vpop.f32.mrb[0].mxu0
      %553 = vmatprep.mubr.f32.mxu0 0.0
      %554 = vmatmul.mubr.f32.gmra.mrb[0].mxu0 %v348
      %v555 = vpop.f32.mrb[0].mxu0
      %v556 = vadd.f32 0.0, %v555
      %v557 = vpop.f32.mrb[0].mxu0
      %558 = vmatprep.mubr.f32.mxu0 0.0
      %559 = vmatmul.mubr.f32.gmra.mrb[0].mxu0 %v351
      %v560 = vpop.f32.mrb[0].mxu0
      %v561 = vadd.f32 0.0, %v560
      %v562 = vpop.f32.mrb[0].mxu0
      %563 = vmatprep.mubr.f32.mxu0 0.0
      %564 = vmatmul.mubr.f32.gmra.mrb[0].mxu0 %v354
      %v565 = vpop.f32.mrb[0].mxu0
      %v566 = vadd.f32 0.0, %v565
      %v567 = vpop.f32.mrb[0].mxu0
      %568 = vmatprep.mubr.f32.mxu0 0.0
      %569 = vmatmul.mubr.f32.gmra.mrb[0].mxu0 %v357
      %v570 = vpop.f32.mrb[0].mxu0
      %v571 = vadd.f32 0.0, %v570
      %v572 = vpop.f32.mrb[0].mxu0
      %573 = vmatprep.mubr.f32.mxu0 0.0
      %574 = vmatmul.mubr.f32.gmra.mrb[0].mxu0 %v360
      %v575 = vpop.f32.mrb[0].mxu0
      %v576 = vadd.f32 0.0, %v575
      %v577 = vpop.f32.mrb[0].mxu0
      %578 = vmatprep.mubr.f32.mxu0 0.0
      %579 = vmatmul.mubr.f32.gmra.mrb[0].mxu0 %v363
      %v580 = vpop.f32.mrb[0].mxu0
      %v581 = vadd.f32 0.0, %v580
      %v582 = vpop.f32.mrb[0].mxu0
      %583 = vmatprep.mubr.f32.mxu0 0.0
      %584 = vmatmul.mubr.f32.gmra.mrb[0].mxu0 %v366
      %v585 = vpop.f32.mrb[0].mxu0
      %v586 = vadd.f32 0.0, %v585
      %v587 = vpop.f32.mrb[0].mxu0
      %588 = vmatprep.mubr.f32.mxu0 0.0
      %589 = vmatmul.mubr.f32.gmra.mrb[0].mxu0 %v369
      %v590 = vpop.f32.mrb[0].mxu0
      %v591 = vadd.f32 0.0, %v590
      %v592 = vpop.f32.mrb[0].mxu0
      %593 = vmatprep.mubr.f32.mxu0 0.0
      %594 = vmatmul.mubr.f32.gmra.mrb[0].mxu0 %v372
      %v595 = vpop.f32.mrb[0].mxu0
      %v596 = vadd.f32 0.0, %v595
      %v597 = vpop.f32.mrb[0].mxu0
      %598 = vdwg.mxu0
      %v600 = vlaneseq
      %v601 = vshrl.u32 %v600, 7
      %v602 = vsub.s32 0, %v601
      %v603 = vrot.slane %v234, %v602
      %v605 = vmul.f32 %v441, %v603
      %v606 = vmul.f32 %v446, %v603
      %v607 = vmul.f32 %v451, %v603
      %v608 = vmul.f32 %v456, %v603
      %v609 = vmul.f32 %v461, %v603
      %v610 = vmul.f32 %v466, %v603
      %v611 = vmul.f32 %v471, %v603
      %v612 = vmul.f32 %v476, %v603
      %v613 = vmul.f32 %v481, %v603
      %v614 = vmul.f32 %v486, %v603
      %v615 = vmul.f32 %v491, %v603
      %v616 = vmul.f32 %v496, %v603
      %v617 = vmul.f32 %v501, %v603
      %v618 = vmul.f32 %v506, %v603
      %v619 = vmul.f32 %v511, %v603
      %v620 = vmul.f32 %v516, %v603
      %v621 = vmul.f32 %v521, %v603
      %v622 = vmul.f32 %v526, %v603
      %v623 = vmul.f32 %v531, %v603
      %v624 = vmul.f32 %v536, %v603
      %v625 = vmul.f32 %v541, %v603
      %v626 = vmul.f32 %v546, %v603
      %v627 = vmul.f32 %v551, %v603
      %v628 = vmul.f32 %v556, %v603
      %v629 = vmul.f32 %v561, %v603
      %v630 = vmul.f32 %v566, %v603
      %v631 = vmul.f32 %v571, %v603
      %v632 = vmul.f32 %v576, %v603
      %v633 = vmul.f32 %v581, %v603
      %v634 = vmul.f32 %v586, %v603
      %v635 = vmul.f32 %v591, %v603
      %v636 = vmul.f32 %v596, %v603
      %v638 = vlaneseq
      %v639 = vshrl.u32 %v638, 7
      %v640 = vsub.s32 0, %v639
      %v641 = vrot.slane %v235, %v640
      %v643 = vadd.f32 %v605, %v641
      %v644 = vadd.f32 %v606, %v641
      %v645 = vadd.f32 %v607, %v641
      %v646 = vadd.f32 %v608, %v641
      %v647 = vadd.f32 %v609, %v641
      %v648 = vadd.f32 %v610, %v641
      %v649 = vadd.f32 %v611, %v641
      %v650 = vadd.f32 %v612, %v641
      %v651 = vadd.f32 %v613, %v641
      %v652 = vadd.f32 %v614, %v641
      %v653 = vadd.f32 %v615, %v641
      %v654 = vadd.f32 %v616, %v641
      %v655 = vadd.f32 %v617, %v641
      %v656 = vadd.f32 %v618, %v641
      %v657 = vadd.f32 %v619, %v641
      %v658 = vadd.f32 %v620, %v641
      %v659 = vadd.f32 %v621, %v641
      %v660 = vadd.f32 %v622, %v641
      %v661 = vadd.f32 %v623, %v641
      %v662 = vadd.f32 %v624, %v641
      %v663 = vadd.f32 %v625, %v641
      %v664 = vadd.f32 %v626, %v641
      %v665 = vadd.f32 %v627, %v641
      %v666 = vadd.f32 %v628, %v641
      %v667 = vadd.f32 %v629, %v641
      %v668 = vadd.f32 %v630, %v641
      %v669 = vadd.f32 %v631, %v641
      %v670 = vadd.f32 %v632, %v641
      %v671 = vadd.f32 %v633, %v641
      %v672 = vadd.f32 %v634, %v641
      %v673 = vadd.f32 %v635, %v641
      %v674 = vadd.f32 %v636, %v641
      %vm675 = vcmp.ge.f32.partialorder %v643, 0.0
      %vm676 = vcmp.ge.f32.partialorder %v644, 0.0
      %vm677 = vcmp.ge.f32.partialorder %v645, 0.0
      %vm678 = vcmp.ge.f32.partialorder %v646, 0.0
      %vm679 = vcmp.ge.f32.partialorder %v647, 0.0
      %vm680 = vcmp.ge.f32.partialorder %v648, 0.0
      %vm681 = vcmp.ge.f32.partialorder %v649, 0.0
      %vm682 = vcmp.ge.f32.partialorder %v650, 0.0
      %vm683 = vcmp.ge.f32.partialorder %v651, 0.0
      %vm684 = vcmp.ge.f32.partialorder %v652, 0.0
      %vm685 = vcmp.ge.f32.partialorder %v653, 0.0
      %vm686 = vcmp.ge.f32.partialorder %v654, 0.0
      %vm687 = vcmp.ge.f32.partialorder %v655, 0.0
      %vm688 = vcmp.ge.f32.partialorder %v656, 0.0
      %vm689 = vcmp.ge.f32.partialorder %v657, 0.0
      %vm690 = vcmp.ge.f32.partialorder %v658, 0.0
      %vm691 = vcmp.ge.f32.partialorder %v659, 0.0
      %vm692 = vcmp.ge.f32.partialorder %v660, 0.0
      %vm693 = vcmp.ge.f32.partialorder %v661, 0.0
      %vm694 = vcmp.ge.f32.partialorder %v662, 0.0
      %vm695 = vcmp.ge.f32.partialorder %v663, 0.0
      %vm696 = vcmp.ge.f32.partialorder %v664, 0.0
      %vm697 = vcmp.ge.f32.partialorder %v665, 0.0
      %vm698 = vcmp.ge.f32.partialorder %v666, 0.0
      %vm699 = vcmp.ge.f32.partialorder %v667, 0.0
      %vm700 = vcmp.ge.f32.partialorder %v668, 0.0
      %vm701 = vcmp.ge.f32.partialorder %v669, 0.0
      %vm702 = vcmp.ge.f32.partialorder %v670, 0.0
      %vm703 = vcmp.ge.f32.partialorder %v671, 0.0
      %vm704 = vcmp.ge.f32.partialorder %v672, 0.0
      %vm705 = vcmp.ge.f32.partialorder %v673, 0.0
      %vm706 = vcmp.ge.f32.partialorder %v674, 0.0
      %v707 = vmul.f32 %v643, 0.01
      %v708 = vmul.f32 %v644, 0.01
      %v709 = vmul.f32 %v645, 0.01
      %v710 = vmul.f32 %v646, 0.01
      %v711 = vmul.f32 %v647, 0.01
      %v712 = vmul.f32 %v648, 0.01
      %v713 = vmul.f32 %v649, 0.01
      %v714 = vmul.f32 %v650, 0.01
      %v715 = vmul.f32 %v651, 0.01
      %v716 = vmul.f32 %v652, 0.01
      %v717 = vmul.f32 %v653, 0.01
      %v718 = vmul.f32 %v654, 0.01
      %v719 = vmul.f32 %v655, 0.01
      %v720 = vmul.f32 %v656, 0.01
      %v721 = vmul.f32 %v657, 0.01
      %v722 = vmul.f32 %v658, 0.01
      %v723 = vmul.f32 %v659, 0.01
      %v724 = vmul.f32 %v660, 0.01
      %v725 = vmul.f32 %v661, 0.01
      %v726 = vmul.f32 %v662, 0.01
      %v727 = vmul.f32 %v663, 0.01
      %v728 = vmul.f32 %v664, 0.01
      %v729 = vmul.f32 %v665, 0.01
      %v730 = vmul.f32 %v666, 0.01
      %v731 = vmul.f32 %v667, 0.01
      %v732 = vmul.f32 %v668, 0.01
      %v733 = vmul.f32 %v669, 0.01
      %v734 = vmul.f32 %v670, 0.01
      %v735 = vmul.f32 %v671, 0.01
      %v736 = vmul.f32 %v672, 0.01
      %v737 = vmul.f32 %v673, 0.01
      %v738 = vmul.f32 %v674, 0.01
      %v739 = vsel %vm675, %v643, %v707
      %v740 = vsel %vm676, %v644, %v708
      %v741 = vsel %vm677, %v645, %v709
      %v742 = vsel %vm678, %v646, %v710
      %v743 = vsel %vm679, %v647, %v711
      %v744 = vsel %vm680, %v648, %v712
      %v745 = vsel %vm681, %v649, %v713
      %v746 = vsel %vm682, %v650, %v714
      %v747 = vsel %vm683, %v651, %v715
      %v748 = vsel %vm684, %v652, %v716
      %v749 = vsel %vm685, %v653, %v717
      %v750 = vsel %vm686, %v654, %v718
      %v751 = vsel %vm687, %v655, %v719
      %v752 = vsel %vm688, %v656, %v720
      %v753 = vsel %vm689, %v657, %v721
      %v754 = vsel %vm690, %v658, %v722
      %v755 = vsel %vm691, %v659, %v723
      %v756 = vsel %vm692, %v660, %v724
      %v757 = vsel %vm693, %v661, %v725
      %v758 = vsel %vm694, %v662, %v726
      %v759 = vsel %vm695, %v663, %v727
      %v760 = vsel %vm696, %v664, %v728
      %v761 = vsel %vm697, %v665, %v729
      %v762 = vsel %vm698, %v666, %v730
      %v763 = vsel %vm699, %v667, %v731
      %v764 = vsel %vm700, %v668, %v732
      %v765 = vsel %vm701, %v669, %v733
      %v766 = vsel %vm702, %v670, %v734
      %v767 = vsel %vm703, %v671, %v735
      %v768 = vsel %vm704, %v672, %v736
      %v769 = vsel %vm705, %v673, %v737
      %v770 = vsel %vm706, %v674, %v738
      %771 = vst [vmem:[%s233] sm:$0xff] %v739
      %772 = vst [vmem:[%s233 + $0x8] sm:$0xff] %v740
      %773 = vst [vmem:[%s233 + $0x10] sm:$0xff] %v741
      %774 = vst [vmem:[%s233 + $0x18] sm:$0xff] %v742
      %775 = vst [vmem:[%s233 + $0x20] sm:$0xff] %v743
      %776 = vst [vmem:[%s233 + $0x28] sm:$0xff] %v744
      %777 = vst [vmem:[%s233 + $0x30] sm:$0xff] %v745
      %778 = vst [vmem:[%s233 + $0x38] sm:$0xff] %v746
      %779 = vst [vmem:[%s233 + $0x40] sm:$0xff] %v747
      %780 = vst [vmem:[%s233 + $0x48] sm:$0xff] %v748
      %781 = vst [vmem:[%s233 + $0x50] sm:$0xff] %v749
      %782 = vst [vmem:[%s233 + $0x58] sm:$0xff] %v750
      %783 = vst [vmem:[%s233 + $0x60] sm:$0xff] %v751
      %784 = vst [vmem:[%s233 + $0x68] sm:$0xff] %v752
      %785 = vst [vmem:[%s233 + $0x70] sm:$0xff] %v753
      %786 = vst [vmem:[%s233 + $0x78] sm:$0xff] %v754
      %787 = vst [vmem:[%s233 + $0x80] sm:$0xff] %v755
      %788 = vst [vmem:[%s233 + $0x88] sm:$0xff] %v756
      %789 = vst [vmem:[%s233 + $0x90] sm:$0xff] %v757
      %790 = vst [vmem:[%s233 + $0x98] sm:$0xff] %v758
      %791 = vst [vmem:[%s233 + $0xa0] sm:$0xff] %v759
      %792 = vst [vmem:[%s233 + $0xa8] sm:$0xff] %v760
      %793 = vst [vmem:[%s233 + $0xb0] sm:$0xff] %v761
      %794 = vst [vmem:[%s233 + $0xb8] sm:$0xff] %v762
      %795 = vst [vmem:[%s233 + $0xc0] sm:$0xff] %v763
      %796 = vst [vmem:[%s233 + $0xc8] sm:$0xff] %v764
      %797 = vst [vmem:[%s233 + $0xd0] sm:$0xff] %v765
      %798 = vst [vmem:[%s233 + $0xd8] sm:$0xff] %v766
      %799 = vst [vmem:[%s233 + $0xe0] sm:$0xff] %v767
      %800 = vst [vmem:[%s233 + $0xe8] sm:$0xff] %v768
      %801 = vst [vmem:[%s233 + $0xf0] sm:$0xff] %v769
      %802 = vst [vmem:[%s233 + $0xf8] sm:$0xff] %v770
      %v803 = vld [vmem:[%s224 + $0x100] sm:$0xff]
      %v804 = vld [vmem:[%s224 + $0x108] sm:$0xff]
      %v805 = vld [vmem:[%s224 + $0x110] sm:$0xff]
      %v806 = vld [vmem:[%s224 + $0x118] sm:$0xff]
      %v807 = vld [vmem:[%s1] sm:$0xff]
      %v808 = vld [vmem:[%s1 + $0x8] sm:$0xff]
      %v809 = vld [vmem:[%s1 + $0x10] sm:$0xff]
      %v810 = vld [vmem:[%s1 + $0x18] sm:$0xff]
      %v811 = vld [vmem:[%s1 + $0x20] sm:$0xff]
      %v812 = vld [vmem:[%s1 + $0x28] sm:$0xff]
      %v813 = vld [vmem:[%s1 + $0x30] sm:$0xff]
      %v814 = vld [vmem:[%s1 + $0x38] sm:$0xff]
      %v815 = vld [vmem:[%s1 + $0x40] sm:$0xff]
      %v817 = vsel %vm277, %v803, 0
      %v820 = vsel %vm277, %v804, 0
      %v823 = vsel %vm277, %v805, 0
      %v826 = vsel %vm277, %v806, 0
      %828 = vmatprep.subr.mxu0 0.0
      %829 = vmatpush1.msra.mxu0 %v807
      %830 = vmatprep.subr.mxu0 0.0
      %831 = vmatpush1.msra.mxu0 %v808
      %832 = vmatprep.subr.mxu0 0.0
      %833 = vmatpush1.msra.mxu0 %v809
      %834 = vmatprep.subr.mxu0 0.0
      %835 = vmatpush1.msra.mxu0 %v810
      %836 = vmatprep.subr.mxu0 0.0
      %837 = vmatpush1.msra.mxu0 %v811
      %838 = vmatprep.subr.mxu0 0.0
      %839 = vmatpush1.msra.mxu0 %v812
      %840 = vmatprep.subr.mxu0 0.0
      %841 = vmatpush1.msra.mxu0 %v813
      %842 = vmatprep.subr.mxu0 0.0
      %843 = vmatpush1.msra.mxu0 %v814
      %844 = vmatprep.subr.mxu0 0.0
      %845 = vmatpush1.msra.mxu0 %v815
      %846 = vmatprep.subr.mxu0 0.0
      %847 = vmatpush1.msra.mxu0 0.0
      %848 = vmatprep.subr.mxu0 0.0
      %849 = vmatpush1.msra.mxu0 0.0
      %850 = vmatprep.subr.mxu0 0.0
      %851 = vmatpush1.msra.mxu0 0.0
      %852 = vmatprep.subr.mxu0 0.0
      %853 = vmatpush1.msra.mxu0 0.0
      %854 = vmatprep.subr.mxu0 0.0
      %855 = vmatpush1.msra.mxu0 0.0
      %856 = vmatprep.subr.mxu0 0.0
      %857 = vmatpush1.msra.mxu0 0.0
      %858 = vmatprep.subr.mxu0 0.0
      %859 = vmatpush1.msra.mxu0 0.0
      %860 = vmatprep.subr.mxu0 0.0
      %861 = vmatpush1.msra.mxu0 0.0
      %862 = vmatprep.subr.mxu0 0.0
      %863 = vmatpush1.msra.mxu0 0.0
      %864 = vmatprep.subr.mxu0 0.0
      %865 = vmatpush1.msra.mxu0 0.0
      %866 = vmatprep.subr.mxu0 0.0
      %867 = vmatpush1.msra.mxu0 0.0
      %868 = vmatprep.subr.mxu0 0.0
      %869 = vmatpush1.msra.mxu0 0.0
      %870 = vmatprep.subr.mxu0 0.0
      %871 = vmatpush1.msra.mxu0 0.0
      %872 = vmatprep.subr.mxu0 0.0
      %873 = vmatpush1.msra.mxu0 0.0
      %874 = vmatprep.subr.mxu0 0.0
      %875 = vmatpush1.msra.mxu0 0.0
      %876 = vmatprep.subr.mxu0 0.0
      %877 = vmatpush1.msra.mxu0 0.0
      %878 = vmatprep.subr.mxu0 0.0
      %879 = vmatpush1.msra.mxu0 0.0
      %880 = vmatprep.subr.mxu0 0.0
      %881 = vmatpush1.msra.mxu0 0.0
      %882 = vmatprep.subr.mxu0 0.0
      %883 = vmatpush1.msra.mxu0 0.0
      %884 = vmatprep.subr.mxu0 0.0
      %885 = vmatpush1.msra.mxu0 0.0
      %886 = vmatprep.subr.mxu0 0.0
      %887 = vmatpush1.msra.mxu0 0.0
      %888 = vmatprep.subr.mxu0 0.0
      %889 = vmatpush1.msra.mxu0 0.0
      %890 = vmatprep.subr.mxu0 0.0
      %891 = vmatpush1.msra.mxu0 0.0
      %892 = vmatprep.mubr.f32.mxu0 0.0
      %893 = vmatmul.mubr.f32.gmra.mrb[0].mxu0 %v817
      %v894 = vpop.f32.mrb[0].mxu0
      %v895 = vadd.f32 0.0, %v894
      %v896 = vpop.f32.mrb[0].mxu0
      %897 = vmatprep.mubr.f32.mxu0 0.0
      %898 = vmatmul.mubr.f32.gmra.mrb[0].mxu0 %v820
      %v899 = vpop.f32.mrb[0].mxu0
      %v900 = vadd.f32 0.0, %v899
      %v901 = vpop.f32.mrb[0].mxu0
      %902 = vmatprep.mubr.f32.mxu0 0.0
      %903 = vmatmul.mubr.f32.gmra.mrb[0].mxu0 %v823
      %v904 = vpop.f32.mrb[0].mxu0
      %v905 = vadd.f32 0.0, %v904
      %v906 = vpop.f32.mrb[0].mxu0
      %907 = vmatprep.mubr.f32.mxu0 0.0
      %908 = vmatmul.mubr.f32.gmra.mrb[0].mxu0 %v826
      %v909 = vpop.f32.mrb[0].mxu0
      %v910 = vadd.f32 0.0, %v909
      %v911 = vpop.f32.mrb[0].mxu0
      %912 = vdwg.mxu0
      %v913 = vmul.f32 %v895, %v603
      %v914 = vmul.f32 %v900, %v603
      %v915 = vmul.f32 %v905, %v603
      %v916 = vmul.f32 %v910, %v603
      %v917 = vadd.f32 %v913, %v641
      %v918 = vadd.f32 %v914, %v641
      %v919 = vadd.f32 %v915, %v641
      %v920 = vadd.f32 %v916, %v641
      %vm921 = vcmp.ge.f32.partialorder %v917, 0.0
      %vm922 = vcmp.ge.f32.partialorder %v918, 0.0
      %vm923 = vcmp.ge.f32.partialorder %v919, 0.0
      %vm924 = vcmp.ge.f32.partialorder %v920, 0.0
      %v925 = vmul.f32 %v917, 0.01
      %v926 = vmul.f32 %v918, 0.01
      %v927 = vmul.f32 %v919, 0.01
      %v928 = vmul.f32 %v920, 0.01
      %v929 = vsel %vm921, %v917, %v925
      %v930 = vsel %vm922, %v918, %v926
      %v931 = vsel %vm923, %v919, %v927
      %v932 = vsel %vm924, %v920, %v928
      %933 = vst [vmem:[%s233 + $0x100] sm:$0xff] %v929
      %934 = vst [vmem:[%s233 + $0x108] sm:$0xff] %v930
      %935 = vst [vmem:[%s233 + $0x110] sm:$0xff] %v931
      %936 = vst [vmem:[%s233 + $0x118] sm:$0xff] %v932
      %p937 = scmp.lt.s32.totalorder %s19, 1
      %s938 = scalar_select %p937, %s19, 1
      %p939 = scmp.lt.s32.totalorder %s20, 0
      %s940 = scalar_select %p939, %s20, 0
      %s941 = smul.addr %s940, 36
      %s942 = smul.addr %s938, 36
      %s943 = sadd.s32 %s941, %s942
      %s944 = smul.addr %s943, 8
      %s945 = scalar_lea.vmem %s4, %s944
      // Predicated region
      $region37: #{conv_dropout_norm_nonlin.1} parent=35 // pred_check
        %p946 = pneg %p138
      $region38: #{conv_dropout_norm_nonlin.1} parent=35 // pred_check_branch
        %948 = sbr.rel (%p946) target = $region40
      $region39: #{conv_dropout_norm_nonlin.1} parent=35 // pred_region
        _
      $region40: #{conv_dropout_norm_nonlin.1} parent=35 // pred_fallthru
        _
    $region36: #{conv_dropout_norm_nonlin.1} parent=5 // pred_fallthru
      _
    %p949 = scmp.le.s32.totalorder 2, %s10
    // Predicated region
    $region41: #{conv_dropout_norm_nonlin.1} parent=5 // pred_check
      %p950 = pneg %p949
    $region42: #{conv_dropout_norm_nonlin.1} parent=5 // pred_check_branch
      %952 = sbr.rel (%p950) target = $region44
    $region43: #{conv_dropout_norm_nonlin.1} parent=5 // pred_region
      %s953 = ssub.s32 %s10, 2
      // Predicated region
      $region45: #{conv_dropout_norm_nonlin.1} parent=43 // pred_check
        %p954 = pneg %p144
      $region46: #{conv_dropout_norm_nonlin.1} parent=43 // pred_check_branch
        %956 = sbr.rel (%p954) target = $region48
      $region47: #{conv_dropout_norm_nonlin.1} parent=43 // pred_region
        %p957 = scmp.lt.s32.totalorder %s21, 1
        %s958 = scalar_select %p957, %s21, 1
        %p959 = scmp.lt.s32.totalorder %s22, 0
        %s960 = scalar_select %p959, %s22, 0
        %s961 = smul.addr %s960, 36
        %s962 = smul.addr %s958, 36
        %s963 = sadd.s32 %s961, %s962
        %s964 = smul.addr %s963, 8
        %s965 = scalar_lea.vmem %s4, %s964
      $region48: #{conv_dropout_norm_nonlin.1} parent=43 // pred_fallthru
        _
    $region44: #{conv_dropout_norm_nonlin.1} parent=5 // pred_fallthru
      _
  $region6: #{conv_dropout_norm_nonlin.1} parent=0 // loop_footer
    %s14 = sadd.s32 1, %s10
  $region7: #{conv_dropout_norm_nonlin.1} parent=0 // loop_footer_branch
    %9 = sbr.rel target = $region3
  $region8: #{conv_dropout_norm_nonlin.1} parent=0 // loop_exit
    _

</llo_original>
